<compile_context>
chip_gen: v7x
topology: tpu7x:2x2x1
jax: 0.10.0
libtpu: 0.0.40
codegen_flags: <defaults>
</compile_context>

<pallas_src>
import functools

import jax
import jax.numpy as jnp
from jax.experimental import pallas as pl
from jax.experimental.pallas import tpu as pltpu

_LANE = 128  # lane-dense padded class dimension

_ACTIVATIONS = {
    "relu": lambda h: jnp.maximum(h, 0.0),
    "gelu": jax.nn.gelu,
    "tanh": jnp.tanh,
}


def _make_head_kernel(act_fn):
    """Fused MLP head: out = act(x @ W1 + b1) @ W2p + b2p (W2p/b2p lane-padded)."""

    def kernel(x_ref, w1_ref, b1_ref, w2_ref, b2_ref, out_ref):
        # layer 1: cast activations to bf16 in-register (no extra HBM traffic),
        # bf16 weights already resident -> native MXU rate, f32 accumulation.
        x_bf16 = x_ref[...].astype(jnp.bfloat16)
        h = jnp.dot(x_bf16, w1_ref[...], preferred_element_type=jnp.float32)
        # bias + activation in f32 on the VPU
        h = act_fn(h + b1_ref[...])
        # layer 2: tiny (TB, L) @ (L, 128) matmul -> lane-dense logits slab.
        # MXU has huge slack here; not worth further structural effort.
        logits = jnp.dot(h, w2_ref[...], preferred_element_type=jnp.float32)
        out_ref[...] = (logits + b2_ref[...]).astype(out_ref.dtype)

    return kernel


def classifier_head(x, w1, b1, w2, b2, *, activation="relu", tile_b=256):
    """Pallas wrapper.

    x:  [B, 768] f32 pooled CLS embeddings
    w1: [768, L] f32, b1: [1, L] f32   (class_layer1)
    w2: [L, 3]   f32, b2: [1, 3] f32   (class_layer2)
    returns logits [B, 3] f32 (softmax intentionally NOT applied, as in forward).
    """
    B, H = x.shape
    L = w1.shape[1]
    C = w2.shape[1]
    act_fn = _ACTIVATIONS[activation]

    # Weight for the dominant matmul stored/streamed as bf16 (resident, read once).
    w1_bf16 = w1.astype(jnp.bfloat16)

    # lane-dense output: zero-pad the class dim to 128 lanes; slice back below.
    w2p = jnp.zeros((L, _LANE), jnp.float32).at[:, :C].set(w2.astype(jnp.float32))
    b2p = jnp.zeros((1, _LANE), jnp.float32).at[:, :C].set(b2.astype(jnp.float32))

    # batch tiling: full-extent single block for small B (exempt from the (8,128)
    # rule), otherwise MXU-height tiles; Pallas handles the partial last block.
    TB = B if B <= tile_b else tile_b  # tile_b is a multiple of 8
    nb = pl.cdiv(B, TB)

    out_padded = pl.pallas_call(
        _make_head_kernel(act_fn),
        out_shape=jax.ShapeDtypeStruct((B, _LANE), jnp.float32),
        grid_spec=pl.GridSpec(
            grid=(nb,),
            in_specs=[
                pl.BlockSpec((TB, H), lambda b: (b, 0)),     # x tile (pipelined)
                pl.BlockSpec((H, L), lambda b: (0, 0)),      # W1 (bf16) resident
                pl.BlockSpec((1, L), lambda b: (0, 0)),      # b1 resident
                pl.BlockSpec((L, _LANE), lambda b: (0, 0)),  # W2 (padded) resident
                pl.BlockSpec((1, _LANE), lambda b: (0, 0)),  # b2 (padded) resident
            ],
            out_specs=pl.BlockSpec((TB, _LANE), lambda b: (b, 0)),
        ),
        compiler_params=pltpu.CompilerParams(
            # batch axis is independent -> shardable across v7x's 2 TensorCores
            dimension_semantics=("parallel",),
        ),
    )(x, w1_bf16, b1, w2p, b2p)

    return out_padded[:, :C]


def _torch_linear_init(key, fan_in, fan_out):
    """Deterministic init matching torch.nn.Linear default (U[-1/sqrt(in), 1/sqrt(in)])."""
    kw, kb = jax.random.split(key)
    bound = 1.0 / jnp.sqrt(jnp.float32(fan_in))
    w = jax.random.uniform(kw, (fan_in, fan_out), jnp.float32, -bound, bound)
    b = jax.random.uniform(kb, (1, fan_out), jnp.float32, -bound, bound)
    return w, b


if __name__ == "__main__":
    # Small, deterministic problem consistent with the module's head:
    #   batch=2 pooled embeddings of size 768, layer_size=32, 3 classes.
    batch = 2
    hidden = 768       # roberta pooler_output dim (fixed by nn.Linear(768, layer_size))
    layer_size = 32
    num_classes = 3

    key = jax.random.PRNGKey(0)
    k_x, k_l1, k_l2 = jax.random.split(key, 3)

    # Synthetic stand-in for roberta_output.pooler_output ([B, 768]).
    x = jax.random.normal(k_x, (batch, hidden), jnp.float32)

    w1, b1 = _torch_linear_init(k_l1, hidden, layer_size)       # class_layer1
    w2, b2 = _torch_linear_init(k_l2, layer_size, num_classes)  # class_layer2

    logits = classifier_head(x, w1, b1, w2, b2, activation="relu")
    logits = jax.block_until_ready(logits)
    assert logits.shape == (batch, num_classes)

    # Reference with the same bf16 layer-1 operands (tight tolerance).
    h_ref = jnp.maximum(
        jnp.dot(x.astype(jnp.bfloat16), w1.astype(jnp.bfloat16),
                preferred_element_type=jnp.float32) + b1, 0.0)
    ref_bf16 = h_ref @ w2 + b2
    assert jnp.allclose(logits, ref_bf16, atol=1e-3, rtol=1e-3)

    # Sanity vs. the full-f32 PyTorch-equivalent math (loose tolerance for the
    # bf16 cast of the 768-dim matmul operands).
    ref_f32 = jnp.maximum(x @ w1 + b1, 0.0) @ w2 + b2
    assert jnp.allclose(logits, ref_f32, atol=5e-2, rtol=5e-2)

    print("KERNEL_OK")
</pallas_src>

<mosaic_0001>
module attributes {stable_mosaic.version = 11 : i64} {
  func.func @kernel(%arg0: i32, %arg1: memref<2x768xf32, #tpu.memory_space<vmem>>, %arg2: memref<768x32xbf16, #tpu.memory_space<vmem>>, %arg3: memref<1x32xf32, #tpu.memory_space<vmem>>, %arg4: memref<32x128xf32, #tpu.memory_space<vmem>>, %arg5: memref<1x128xf32, #tpu.memory_space<vmem>>, %arg6: memref<2x128xf32, #tpu.memory_space<vmem>>) attributes {dimension_semantics = [#tpu.dimension_semantics<parallel>], iteration_bounds = array<i64: 1>, scalar_prefetch = 0 : i64, scratch_operands = 0 : i64, tpu.core_type = #tpu.core_type<tc>, window_params = [{transform_indices = @transform_0, window_bounds = array<i64: 2, 768>}, {pipeline_mode = #tpu.pipeline_mode<synchronous>, transform_indices = @transform_1, window_bounds = array<i64: 768, 32>}, {pipeline_mode = #tpu.pipeline_mode<synchronous>, transform_indices = @transform_2, window_bounds = array<i64: 1, 32>}, {pipeline_mode = #tpu.pipeline_mode<synchronous>, transform_indices = @transform_3, window_bounds = array<i64: 32, 128>}, {pipeline_mode = #tpu.pipeline_mode<synchronous>, transform_indices = @transform_4, window_bounds = array<i64: 1, 128>}, {transform_indices = @transform_5, window_bounds = array<i64: 2, 128>}]} {
    %c0 = arith.constant 0 : index
    %c0_0 = arith.constant 0 : index
    %0 = vector.load %arg1[%c0, %c0_0] : memref<2x768xf32, #tpu.memory_space<vmem>>, vector<2x768xf32>
    %1 = arith.truncf %0 : vector<2x768xf32> to vector<2x768xbf16>
    %c0_1 = arith.constant 0 : index
    %c0_2 = arith.constant 0 : index
    %2 = vector.load %arg2[%c0_1, %c0_2] : memref<768x32xbf16, #tpu.memory_space<vmem>>, vector<768x32xbf16>
    %cst = arith.constant dense<0.000000e+00> : vector<2x32xf32>
    %3 = tpu.matmul %1, %2, %cst {dimension_numbers = #tpu.dot_dimension_numbers<[1], [0], [0], [1], [0, 0, 1, 1], [], []>} : vector<2x768xbf16>, vector<768x32xbf16>, vector<2x32xf32> -> vector<2x32xf32>
    %c0_3 = arith.constant 0 : index
    %c0_4 = arith.constant 0 : index
    %4 = vector.load %arg3[%c0_3, %c0_4] : memref<1x32xf32, #tpu.memory_space<vmem>>, vector<1x32xf32>
    %5 = vector.broadcast %4 : vector<1x32xf32> to vector<2x32xf32>
    %6 = arith.addf %3, %5 : vector<2x32xf32>
    %cst_5 = arith.constant 0.000000e+00 : f32
    %7 = vector.broadcast %cst_5 : f32 to vector<2x32xf32>
    %8 = arith.maximumf %6, %7 : vector<2x32xf32>
    %c0_6 = arith.constant 0 : index
    %c0_7 = arith.constant 0 : index
    %9 = vector.load %arg4[%c0_6, %c0_7] : memref<32x128xf32, #tpu.memory_space<vmem>>, vector<32x128xf32>
    %cst_8 = arith.constant dense<0.000000e+00> : vector<2x128xf32>
    %10 = tpu.matmul %8, %9, %cst_8 {dimension_numbers = #tpu.dot_dimension_numbers<[1], [0], [0], [1], [0, 0, 1, 1], [], []>} : vector<2x32xf32>, vector<32x128xf32>, vector<2x128xf32> -> vector<2x128xf32>
    %c0_9 = arith.constant 0 : index
    %c0_10 = arith.constant 0 : index
    %11 = vector.load %arg5[%c0_9, %c0_10] : memref<1x128xf32, #tpu.memory_space<vmem>>, vector<1x128xf32>
    %12 = vector.broadcast %11 : vector<1x128xf32> to vector<2x128xf32>
    %13 = arith.addf %10, %12 : vector<2x128xf32>
    %c0_11 = arith.constant 0 : index
    %c0_12 = arith.constant 0 : index
    %14 = vector.load %arg6[%c0_11, %c0_12] : memref<2x128xf32, #tpu.memory_space<vmem>>, vector<2x128xf32>
    tpu.vector_store %arg6[%c0_11, %c0_12], %13 {strides = array<i32>} : memref<2x128xf32, #tpu.memory_space<vmem>>, vector<2x128xf32>,
    return
  }
  func.func @transform_0(%arg0: i32) -> (i32, i32) {
    %c0_i32 = arith.constant 0 : i32
    %c0_i32_0 = arith.constant 0 : i32
    return %arg0, %c0_i32 : i32, i32
  }
  func.func @transform_1(%arg0: i32) -> (i32, i32) {
    %c0_i32 = arith.constant 0 : i32
    %c0_i32_0 = arith.constant 0 : i32
    %c0_i32_1 = arith.constant 0 : i32
    return %c0_i32, %c0_i32_0 : i32, i32
  }
  func.func @transform_2(%arg0: i32) -> (i32, i32) {
    %c0_i32 = arith.constant 0 : i32
    %c0_i32_0 = arith.constant 0 : i32
    %c0_i32_1 = arith.constant 0 : i32
    return %c0_i32, %c0_i32_0 : i32, i32
  }
  func.func @transform_3(%arg0: i32) -> (i32, i32) {
    %c0_i32 = arith.constant 0 : i32
    %c0_i32_0 = arith.constant 0 : i32
    %c0_i32_1 = arith.constant 0 : i32
    return %c0_i32, %c0_i32_0 : i32, i32
  }
  func.func @transform_4(%arg0: i32) -> (i32, i32) {
    %c0_i32 = arith.constant 0 : i32
    %c0_i32_0 = arith.constant 0 : i32
    %c0_i32_1 = arith.constant 0 : i32
    return %c0_i32, %c0_i32_0 : i32, i32
  }
  func.func @transform_5(%arg0: i32) -> (i32, i32) {
    %c0_i32 = arith.constant 0 : i32
    %c0_i32_0 = arith.constant 0 : i32
    return %arg0, %c0_i32 : i32, i32
  }
}

</mosaic_0001>

<llo_original>
// kernel: tpu_custom_call.1
$region0: #{tpu_custom_call.1}
  #allocation0 [shape = 'u32[]', space=smem, size = 0x4, offset = 0x4, fixed_abs, tag = 'smem constant byte address 0x4 - core index']
  #allocation1 [shape = 'u32[144,128]{1,0:T(1,128)}', space=vmem, size = 0x12000, scoped, tag = 'internal scratch']
  %s0 = inlined_call_operand.vmem [shape: f32[2,768], index: 0, kind: input, shape index: {}]
  %s1 = inlined_call_operand.vmem [shape: bf16[768,32], index: 1, kind: input, shape index: {}]
  %s2 = inlined_call_operand.vmem [shape: f32[1,32], index: 2, kind: input, shape index: {}]
  %s3 = inlined_call_operand.vmem [shape: f32[32,128], index: 3, kind: input, shape index: {}]
  %s4 = inlined_call_operand.vmem [shape: f32[1,128], index: 4, kind: input, shape index: {}]
  %s5 = inlined_call_operand.hbm [shape: f32[2,128], index: 5, kind: output, shape index: {}]
  %s6 = sld [smem:[#allocation0]]
  $region30: #{tpu_custom_call.1} parent=0
    _
  %s8 = ssub.s32 1, %s6
  %s9 = scalar_select 0, %s8, %s6
  $region1: #{tpu_custom_call.1} parent=0
    #allocation2 [shape = 'u8[1024]{0}', space=vmem, size = 0x400, scoped, tag = 'output window, operand 0, single buffered']
    #allocation3 [shape = 's32[1]{0}', space=sflag, size = 0x4, scoped, tag = 'scoped memory for tpu_custom_call.1']
    %10 = vsyncpa [#allocation3], 0
    // Predicated region
    $region2: #{tpu_custom_call.1} parent=1 // pred_check
      _
    $region3: #{tpu_custom_call.1} parent=1 // pred_check_branch
      %12 = sbr.rel (0) target = $region5
    $region4: #{tpu_custom_call.1} parent=1 // pred_region
      _
    $region5: #{tpu_custom_call.1} parent=1 // pred_fallthru
      _
    // Predicated region
    $region6: #{tpu_custom_call.1} parent=1 // pred_check
      _
    $region7: #{tpu_custom_call.1} parent=1 // pred_check_branch
      %14 = sbr.rel (0) target = $region9
    $region8: #{tpu_custom_call.1} parent=1 // pred_region
      _
    $region9: #{tpu_custom_call.1} parent=1 // pred_fallthru
      _
    // Predicated region
    $region10: #{tpu_custom_call.1} parent=1 // pred_check
      _
    $region11: #{tpu_custom_call.1} parent=1 // pred_check_branch
      %16 = sbr.rel (0) target = $region13
    $region12: #{tpu_custom_call.1} parent=1 // pred_region
      _
    $region13: #{tpu_custom_call.1} parent=1 // pred_fallthru
      _
    // Predicated region
    $region14: #{tpu_custom_call.1} parent=1 // pred_check
      _
    $region15: #{tpu_custom_call.1} parent=1 // pred_check_branch
      %18 = sbr.rel (0) target = $region17
    $region16: #{tpu_custom_call.1} parent=1 // pred_region
      _
    $region17: #{tpu_custom_call.1} parent=1 // pred_fallthru
      _
    // Predicated region
    $region18: #{tpu_custom_call.1} parent=1 // pred_check
      _
    $region19: #{tpu_custom_call.1} parent=1 // pred_check_branch
      %20 = sbr.rel (0) target = $region21
    $region20: #{tpu_custom_call.1} parent=1 // pred_region
      _
    $region21: #{tpu_custom_call.1} parent=1 // pred_fallthru
      _
    %v22 = vld [vmem:[%s0] sm:$0xff]
    %v23 = vld [vmem:[%s0 + $0x8] sm:$0xf]
    %v26 = vcombine.high %v22, %v22
    %v28 = vunpack.c.l.s4 1983009808
    %v29 = vunpack.c.0.s8 %v28
    %v30 = vlaneseq
    %v31 = vshrl.u32 %v30, 7
    %v32 = vsub.s32 %v29, %v31
    %v33 = vrot.slane %v22, %v32
    %v35 = vunpack.c.l.s4 1983009808
    %v36 = vunpack.c.0.s8 %v35
    %v37 = vlaneseq
    %v38 = vshrl.u32 %v37, 7
    %v39 = vsub.s32 %v36, %v38
    %v40 = vrot.slane %v26, %v39
    %v41 = vcombine.high %v33, %v33
    %v42 = vcombine.high %v40, %v40
    %v44 = vunpack.c.l.s4 1983009808
    %v45 = vunpack.c.0.s8 %v44
    %v46 = vlaneseq
    %v47 = vshrl.u32 %v46, 7
    %v48 = vsub.s32 %v45, %v47
    %v49 = vrot.slane %v23, %v48
    %v50 = vcombine.high %v49, %v49
    %v57 = vpack.c.bf16 %v33, %v33
    %v58 = vpack.c.bf16 %v41, %v41
    %v59 = vpack.c.bf16 %v40, %v40
    %v60 = vpack.c.bf16 %v42, %v42
    %v61 = vpack.c.bf16 %v49, %v49
    %v62 = vpack.c.bf16 %v50, %v50
    %v63 = vld [vmem:[%s1] sm:$0xf]
    %v64 = vld [vmem:[%s1 + $0x4] sm:$0xf]
    %v65 = vld [vmem:[%s1 + $0x8] sm:$0xf]
    %v66 = vld [vmem:[%s1 + $0xc] sm:$0xf]
    %v67 = vld [vmem:[%s1 + $0x10] sm:$0xf]
    %v68 = vld [vmem:[%s1 + $0x14] sm:$0xf]
    %v69 = vld [vmem:[%s1 + $0x18] sm:$0xf]
    %v70 = vld [vmem:[%s1 + $0x1c] sm:$0xf]
    %v71 = vld [vmem:[%s1 + $0x20] sm:$0xf]
    %v72 = vld [vmem:[%s1 + $0x24] sm:$0xf]
    %v73 = vld [vmem:[%s1 + $0x28] sm:$0xf]
    %v74 = vld [vmem:[%s1 + $0x2c] sm:$0xf]
    %v75 = vld [vmem:[%s1 + $0x30] sm:$0xf]
    %v76 = vld [vmem:[%s1 + $0x34] sm:$0xf]
    %v77 = vld [vmem:[%s1 + $0x38] sm:$0xf]
    %v78 = vld [vmem:[%s1 + $0x3c] sm:$0xf]
    %v79 = vld [vmem:[%s1 + $0x40] sm:$0xf]
    %v80 = vld [vmem:[%s1 + $0x44] sm:$0xf]
    %v81 = vld [vmem:[%s1 + $0x48] sm:$0xf]
    %v82 = vld [vmem:[%s1 + $0x4c] sm:$0xf]
    %v83 = vld [vmem:[%s1 + $0x50] sm:$0xf]
    %v84 = vld [vmem:[%s1 + $0x54] sm:$0xf]
    %v85 = vld [vmem:[%s1 + $0x58] sm:$0xf]
    %v86 = vld [vmem:[%s1 + $0x5c] sm:$0xf]
    %v87 = vld [vmem:[%s1 + $0x60] sm:$0xf]
    %v88 = vld [vmem:[%s1 + $0x64] sm:$0xf]
    %v89 = vld [vmem:[%s1 + $0x68] sm:$0xf]
    %v90 = vld [vmem:[%s1 + $0x6c] sm:$0xf]
    %v91 = vld [vmem:[%s1 + $0x70] sm:$0xf]
    %v92 = vld [vmem:[%s1 + $0x74] sm:$0xf]
    %v93 = vld [vmem:[%s1 + $0x78] sm:$0xf]
    %v94 = vld [vmem:[%s1 + $0x7c] sm:$0xf]
    %v95 = vld [vmem:[%s1 + $0x80] sm:$0xf]
    %v96 = vld [vmem:[%s1 + $0x84] sm:$0xf]
    %v97 = vld [vmem:[%s1 + $0x88] sm:$0xf]
    %v98 = vld [vmem:[%s1 + $0x8c] sm:$0xf]
    %v99 = vld [vmem:[%s1 + $0x90] sm:$0xf]
    %v100 = vld [vmem:[%s1 + $0x94] sm:$0xf]
    %v101 = vld [vmem:[%s1 + $0x98] sm:$0xf]
    %v102 = vld [vmem:[%s1 + $0x9c] sm:$0xf]
    %v103 = vld [vmem:[%s1 + $0xa0] sm:$0xf]
    %v104 = vld [vmem:[%s1 + $0xa4] sm:$0xf]
    %v105 = vld [vmem:[%s1 + $0xa8] sm:$0xf]
    %v106 = vld [vmem:[%s1 + $0xac] sm:$0xf]
    %v107 = vld [vmem:[%s1 + $0xb0] sm:$0xf]
    %v108 = vld [vmem:[%s1 + $0xb4] sm:$0xf]
    %v109 = vld [vmem:[%s1 + $0xb8] sm:$0xf]
    %v110 = vld [vmem:[%s1 + $0xbc] sm:$0xf]
    %v111 = vld [vmem:[%s1 + $0xc0] sm:$0xf]
    %v112 = vld [vmem:[%s1 + $0xc4] sm:$0xf]
    %v113 = vld [vmem:[%s1 + $0xc8] sm:$0xf]
    %v114 = vld [vmem:[%s1 + $0xcc] sm:$0xf]
    %v115 = vld [vmem:[%s1 + $0xd0] sm:$0xf]
    %v116 = vld [vmem:[%s1 + $0xd4] sm:$0xf]
    %v117 = vld [vmem:[%s1 + $0xd8] sm:$0xf]
    %v118 = vld [vmem:[%s1 + $0xdc] sm:$0xf]
    %v119 = vld [vmem:[%s1 + $0xe0] sm:$0xf]
    %v120 = vld [vmem:[%s1 + $0xe4] sm:$0xf]
    %v121 = vld [vmem:[%s1 + $0xe8] sm:$0xf]
    %v122 = vld [vmem:[%s1 + $0xec] sm:$0xf]
    %v123 = vld [vmem:[%s1 + $0xf0] sm:$0xf]
    %v124 = vld [vmem:[%s1 + $0xf4] sm:$0xf]
    %v125 = vld [vmem:[%s1 + $0xf8] sm:$0xf]
    %v126 = vld [vmem:[%s1 + $0xfc] sm:$0xf]
    %v127 = vld [vmem:[%s1 + $0x100] sm:$0xf]
    %v128 = vld [vmem:[%s1 + $0x104] sm:$0xf]
    %v129 = vld [vmem:[%s1 + $0x108] sm:$0xf]
    %v130 = vld [vmem:[%s1 + $0x10c] sm:$0xf]
    %v131 = vld [vmem:[%s1 + $0x110] sm:$0xf]
    %v132 = vld [vmem:[%s1 + $0x114] sm:$0xf]
    %v133 = vld [vmem:[%s1 + $0x118] sm:$0xf]
    %v134 = vld [vmem:[%s1 + $0x11c] sm:$0xf]
    %v135 = vld [vmem:[%s1 + $0x120] sm:$0xf]
    %v136 = vld [vmem:[%s1 + $0x124] sm:$0xf]
    %v137 = vld [vmem:[%s1 + $0x128] sm:$0xf]
    %v138 = vld [vmem:[%s1 + $0x12c] sm:$0xf]
    %v139 = vld [vmem:[%s1 + $0x130] sm:$0xf]
    %v140 = vld [vmem:[%s1 + $0x134] sm:$0xf]
    %v141 = vld [vmem:[%s1 + $0x138] sm:$0xf]
    %v142 = vld [vmem:[%s1 + $0x13c] sm:$0xf]
    %v143 = vld [vmem:[%s1 + $0x140] sm:$0xf]
    %v144 = vld [vmem:[%s1 + $0x144] sm:$0xf]
    %v145 = vld [vmem:[%s1 + $0x148] sm:$0xf]
    %v146 = vld [vmem:[%s1 + $0x14c] sm:$0xf]
    %v147 = vld [vmem:[%s1 + $0x150] sm:$0xf]
    %v148 = vld [vmem:[%s1 + $0x154] sm:$0xf]
    %v149 = vld [vmem:[%s1 + $0x158] sm:$0xf]
    %v150 = vld [vmem:[%s1 + $0x15c] sm:$0xf]
    %v151 = vld [vmem:[%s1 + $0x160] sm:$0xf]
    %v152 = vld [vmem:[%s1 + $0x164] sm:$0xf]
    %v153 = vld [vmem:[%s1 + $0x168] sm:$0xf]
    %v154 = vld [vmem:[%s1 + $0x16c] sm:$0xf]
    %v155 = vld [vmem:[%s1 + $0x170] sm:$0xf]
    %v156 = vld [vmem:[%s1 + $0x174] sm:$0xf]
    %v157 = vld [vmem:[%s1 + $0x178] sm:$0xf]
    %v158 = vld [vmem:[%s1 + $0x17c] sm:$0xf]
    %v159 = vld [vmem:[%s2] sm:$0x1]
    %v161 = vlaneseq
    %v162 = vshrl.u32 %v161, 7
    %v163 = vsub.s32 0, %v162
    %v164 = vrot.slane %v159, %v163
    %v262 = vunpack.c.l.b16 %v63
    %v263 = vunpack.c.l.b16 %v64
    %v264 = vunpack.c.l.b16 %v65
    %v265 = vunpack.c.l.b16 %v66
    %v266 = vunpack.c.l.b16 %v67
    %v267 = vunpack.c.l.b16 %v68
    %v268 = vunpack.c.l.b16 %v69
    %v269 = vunpack.c.l.b16 %v70
    %v270 = vunpack.c.l.b16 %v71
    %v271 = vunpack.c.l.b16 %v72
    %v272 = vunpack.c.l.b16 %v73
    %v273 = vunpack.c.l.b16 %v74
    %v274 = vunpack.c.l.b16 %v75
    %v275 = vunpack.c.l.b16 %v76
    %v276 = vunpack.c.l.b16 %v77
    %v277 = vunpack.c.l.b16 %v78
    %v278 = vunpack.c.l.b16 %v79
    %v279 = vunpack.c.l.b16 %v80
    %v280 = vunpack.c.l.b16 %v81
    %v281 = vunpack.c.l.b16 %v82
    %v282 = vunpack.c.l.b16 %v83
    %v283 = vunpack.c.l.b16 %v84
    %v284 = vunpack.c.l.b16 %v85
    %v285 = vunpack.c.l.b16 %v86
    %v286 = vunpack.c.l.b16 %v87
    %v287 = vunpack.c.l.b16 %v88
    %v288 = vunpack.c.l.b16 %v89
    %v289 = vunpack.c.l.b16 %v90
    %v290 = vunpack.c.l.b16 %v91
    %v291 = vunpack.c.l.b16 %v92
    %v292 = vunpack.c.l.b16 %v93
    %v293 = vunpack.c.l.b16 %v94
    %v294 = vunpack.c.l.b16 %v95
    %v295 = vunpack.c.l.b16 %v96
    %v296 = vunpack.c.l.b16 %v97
    %v297 = vunpack.c.l.b16 %v98
    %v298 = vunpack.c.l.b16 %v99
    %v299 = vunpack.c.l.b16 %v100
    %v300 = vunpack.c.l.b16 %v101
    %v301 = vunpack.c.l.b16 %v102
    %v302 = vunpack.c.l.b16 %v103
    %v303 = vunpack.c.l.b16 %v104
    %v304 = vunpack.c.l.b16 %v105
    %v305 = vunpack.c.l.b16 %v106
    %v306 = vunpack.c.l.b16 %v107
    %v307 = vunpack.c.l.b16 %v108
    %v308 = vunpack.c.l.b16 %v109
    %v309 = vunpack.c.l.b16 %v110
    %v310 = vunpack.c.l.b16 %v111
    %v311 = vunpack.c.l.b16 %v112
    %v312 = vunpack.c.l.b16 %v113
    %v313 = vunpack.c.l.b16 %v114
    %v314 = vunpack.c.l.b16 %v115
    %v315 = vunpack.c.l.b16 %v116
    %v316 = vunpack.c.l.b16 %v117
    %v317 = vunpack.c.l.b16 %v118
    %v318 = vunpack.c.l.b16 %v119
    %v319 = vunpack.c.l.b16 %v120
    %v320 = vunpack.c.l.b16 %v121
    %v321 = vunpack.c.l.b16 %v122
    %v322 = vunpack.c.l.b16 %v123
    %v323 = vunpack.c.l.b16 %v124
    %v324 = vunpack.c.l.b16 %v125
    %v325 = vunpack.c.l.b16 %v126
    %v326 = vunpack.c.l.b16 %v127
    %v327 = vunpack.c.l.b16 %v128
    %v328 = vunpack.c.l.b16 %v129
    %v329 = vunpack.c.l.b16 %v130
    %v330 = vunpack.c.l.b16 %v131
    %v331 = vunpack.c.l.b16 %v132
    %v332 = vunpack.c.l.b16 %v133
    %v333 = vunpack.c.l.b16 %v134
    %v334 = vunpack.c.l.b16 %v135
    %v335 = vunpack.c.l.b16 %v136
    %v336 = vunpack.c.l.b16 %v137
    %v337 = vunpack.c.l.b16 %v138
    %v338 = vunpack.c.l.b16 %v139
    %v339 = vunpack.c.l.b16 %v140
    %v340 = vunpack.c.l.b16 %v141
    %v341 = vunpack.c.l.b16 %v142
    %v342 = vunpack.c.l.b16 %v143
    %v343 = vunpack.c.l.b16 %v144
    %v344 = vunpack.c.l.b16 %v145
    %v345 = vunpack.c.l.b16 %v146
    %v346 = vunpack.c.l.b16 %v147
    %v347 = vunpack.c.l.b16 %v148
    %v348 = vunpack.c.l.b16 %v149
    %v349 = vunpack.c.l.b16 %v150
    %v350 = vunpack.c.l.b16 %v151
    %v351 = vunpack.c.l.b16 %v152
    %v352 = vunpack.c.l.b16 %v153
    %v353 = vunpack.c.l.b16 %v154
    %v354 = vunpack.c.l.b16 %v155
    %v355 = vunpack.c.l.b16 %v156
    %v356 = vunpack.c.l.b16 %v157
    %v357 = vunpack.c.l.b16 %v158
    %v358 = vpack.c.b16 %v263, %v262
    %v359 = vpack.c.b16 %v265, %v264
    %v360 = vpack.c.b16 %v267, %v266
    %v361 = vpack.c.b16 %v269, %v268
    %v362 = vpack.c.b16 %v271, %v270
    %v363 = vpack.c.b16 %v273, %v272
    %v364 = vpack.c.b16 %v275, %v274
    %v365 = vpack.c.b16 %v277, %v276
    %v366 = vpack.c.b16 %v279, %v278
    %v367 = vpack.c.b16 %v281, %v280
    %v368 = vpack.c.b16 %v283, %v282
    %v369 = vpack.c.b16 %v285, %v284
    %v370 = vpack.c.b16 %v287, %v286
    %v371 = vpack.c.b16 %v289, %v288
    %v372 = vpack.c.b16 %v291, %v290
    %v373 = vpack.c.b16 %v293, %v292
    %v374 = vpack.c.b16 %v295, %v294
    %v375 = vpack.c.b16 %v297, %v296
    %v376 = vpack.c.b16 %v299, %v298
    %v377 = vpack.c.b16 %v301, %v300
    %v378 = vpack.c.b16 %v303, %v302
    %v379 = vpack.c.b16 %v305, %v304
    %v380 = vpack.c.b16 %v307, %v306
    %v381 = vpack.c.b16 %v309, %v308
    %v382 = vpack.c.b16 %v311, %v310
    %v383 = vpack.c.b16 %v313, %v312
    %v384 = vpack.c.b16 %v315, %v314
    %v385 = vpack.c.b16 %v317, %v316
    %v386 = vpack.c.b16 %v319, %v318
    %v387 = vpack.c.b16 %v321, %v320
    %v388 = vpack.c.b16 %v323, %v322
    %v389 = vpack.c.b16 %v325, %v324
    %v390 = vpack.c.b16 %v327, %v326
    %v391 = vpack.c.b16 %v329, %v328
    %v392 = vpack.c.b16 %v331, %v330
    %v393 = vpack.c.b16 %v333, %v332
    %v394 = vpack.c.b16 %v335, %v334
    %v395 = vpack.c.b16 %v337, %v336
    %v396 = vpack.c.b16 %v339, %v338
    %v397 = vpack.c.b16 %v341, %v340
    %v398 = vpack.c.b16 %v343, %v342
    %v399 = vpack.c.b16 %v345, %v344
    %v400 = vpack.c.b16 %v347, %v346
    %v401 = vpack.c.b16 %v349, %v348
    %v402 = vpack.c.b16 %v351, %v350
    %v403 = vpack.c.b16 %v353, %v352
    %v404 = vpack.c.b16 %v355, %v354
    %v405 = vpack.c.b16 %v357, %v356
    %454 = vmatprep.subr.bf16.mxu0 0
    %455 = vmatpush1.bf16.msra.mxu0 %v358
    %456 = vmatprep.subr.bf16.mxu0 0
    %457 = vmatpush1.bf16.msra.mxu0 %v359
    %458 = vmatprep.subr.bf16.mxu0 0
    %459 = vmatpush1.bf16.msra.mxu0 %v360
    %460 = vmatprep.subr.bf16.mxu0 0
    %461 = vmatpush1.bf16.msra.mxu0 %v361
    %462 = vmatprep.subr.bf16.mxu0 0
    %463 = vmatpush1.bf16.msra.mxu0 %v362
    %464 = vmatprep.subr.bf16.mxu0 0
    %465 = vmatpush1.bf16.msra.mxu0 %v363
    %466 = vmatprep.subr.bf16.mxu0 0
    %467 = vmatpush1.bf16.msra.mxu0 %v364
    %468 = vmatprep.subr.bf16.mxu0 0
    %469 = vmatpush1.bf16.msra.mxu0 %v365
    %470 = vmatprep.subr.bf16.mxu0 0
    %471 = vmatpush1.bf16.msra.mxu0 %v366
    %472 = vmatprep.subr.bf16.mxu0 0
    %473 = vmatpush1.bf16.msra.mxu0 %v367
    %474 = vmatprep.subr.bf16.mxu0 0
    %475 = vmatpush1.bf16.msra.mxu0 %v368
    %476 = vmatprep.subr.bf16.mxu0 0
    %477 = vmatpush1.bf16.msra.mxu0 %v369
    %478 = vmatprep.subr.bf16.mxu0 0
    %479 = vmatpush1.bf16.msra.mxu0 %v370
    %480 = vmatprep.subr.bf16.mxu0 0
    %481 = vmatpush1.bf16.msra.mxu0 %v371
    %482 = vmatprep.subr.bf16.mxu0 0
    %483 = vmatpush1.bf16.msra.mxu0 %v372
    %484 = vmatprep.subr.bf16.mxu0 0
    %485 = vmatpush1.bf16.msra.mxu0 %v373
    %486 = vmatprep.mubr.bf16.mxu0 %v58
    %487 = vmatmul.mubr.bf16.gmra.mrb[0].mxu0 %v57
    %v488 = vpop.f32.mrb[0].mxu0
    %v489 = vadd.f32 %v164, %v488
    %v490 = vpop.f32.mrb[0].mxu0
    %v491 = vpop.f32.mrb[0].mxu0
    %v492 = vpop.f32.mrb[0].mxu0
    %493 = vdwg.mxu0
    %494 = vmatprep.subr.bf16.mxu0 0
    %495 = vmatpush1.bf16.msra.mxu0 %v374
    %496 = vmatprep.subr.bf16.mxu0 0
    %497 = vmatpush1.bf16.msra.mxu0 %v375
    %498 = vmatprep.subr.bf16.mxu0 0
    %499 = vmatpush1.bf16.msra.mxu0 %v376
    %500 = vmatprep.subr.bf16.mxu0 0
    %501 = vmatpush1.bf16.msra.mxu0 %v377
    %502 = vmatprep.subr.bf16.mxu0 0
    %503 = vmatpush1.bf16.msra.mxu0 %v378
    %504 = vmatprep.subr.bf16.mxu0 0
    %505 = vmatpush1.bf16.msra.mxu0 %v379
    %506 = vmatprep.subr.bf16.mxu0 0
    %507 = vmatpush1.bf16.msra.mxu0 %v380
    %508 = vmatprep.subr.bf16.mxu0 0
    %509 = vmatpush1.bf16.msra.mxu0 %v381
    %510 = vmatprep.subr.bf16.mxu0 0
    %511 = vmatpush1.bf16.msra.mxu0 %v382
    %512 = vmatprep.subr.bf16.mxu0 0
    %513 = vmatpush1.bf16.msra.mxu0 %v383
    %514 = vmatprep.subr.bf16.mxu0 0
    %515 = vmatpush1.bf16.msra.mxu0 %v384
    %516 = vmatprep.subr.bf16.mxu0 0
    %517 = vmatpush1.bf16.msra.mxu0 %v385
    %518 = vmatprep.subr.bf16.mxu0 0
    %519 = vmatpush1.bf16.msra.mxu0 %v386
    %520 = vmatprep.subr.bf16.mxu0 0
    %521 = vmatpush1.bf16.msra.mxu0 %v387
    %522 = vmatprep.subr.bf16.mxu0 0
    %523 = vmatpush1.bf16.msra.mxu0 %v388
    %524 = vmatprep.subr.bf16.mxu0 0
    %525 = vmatpush1.bf16.msra.mxu0 %v389
    %526 = vmatprep.mubr.bf16.mxu0 %v60
    %527 = vmatmul.mubr.bf16.gmra.mrb[0].mxu0 %v59
    %v528 = vpop.f32.mrb[0].mxu0
    %v529 = vadd.f32 %v489, %v528
    %v530 = vpop.f32.mrb[0].mxu0
    %v531 = vpop.f32.mrb[0].mxu0
    %v532 = vpop.f32.mrb[0].mxu0
    %533 = vdwg.mxu0
    %534 = vmatprep.subr.bf16.mxu0 0
    %535 = vmatpush1.bf16.msra.mxu0 %v390
    %536 = vmatprep.subr.bf16.mxu0 0
    %537 = vmatpush1.bf16.msra.mxu0 %v391
    %538 = vmatprep.subr.bf16.mxu0 0
    %539 = vmatpush1.bf16.msra.mxu0 %v392
    %540 = vmatprep.subr.bf16.mxu0 0
    %541 = vmatpush1.bf16.msra.mxu0 %v393
    %542 = vmatprep.subr.bf16.mxu0 0
    %543 = vmatpush1.bf16.msra.mxu0 %v394
    %544 = vmatprep.subr.bf16.mxu0 0
    %545 = vmatpush1.bf16.msra.mxu0 %v395
    %546 = vmatprep.subr.bf16.mxu0 0
    %547 = vmatpush1.bf16.msra.mxu0 %v396
    %548 = vmatprep.subr.bf16.mxu0 0
    %549 = vmatpush1.bf16.msra.mxu0 %v397
    %550 = vmatprep.subr.bf16.mxu0 0
    %551 = vmatpush1.bf16.msra.mxu0 %v398
    %552 = vmatprep.subr.bf16.mxu0 0
    %553 = vmatpush1.bf16.msra.mxu0 %v399
    %554 = vmatprep.subr.bf16.mxu0 0
    %555 = vmatpush1.bf16.msra.mxu0 %v400
    %556 = vmatprep.subr.bf16.mxu0 0
    %557 = vmatpush1.bf16.msra.mxu0 %v401
    %558 = vmatprep.subr.bf16.mxu0 0
    %559 = vmatpush1.bf16.msra.mxu0 %v402
    %560 = vmatprep.subr.bf16.mxu0 0
    %561 = vmatpush1.bf16.msra.mxu0 %v403
    %562 = vmatprep.subr.bf16.mxu0 0
    %563 = vmatpush1.bf16.msra.mxu0 %v404
    %564 = vmatprep.subr.bf16.mxu0 0
    %565 = vmatpush1.bf16.msra.mxu0 %v405
    %566 = vmatprep.mubr.bf16.mxu0 %v62
    %567 = vmatmul.mubr.bf16.gmra.mrb[0].mxu0 %v61
    %v568 = vpop.f32.mrb[0].mxu0
    %v569 = vadd.f32 %v529, %v568
    %v570 = vpop.f32.mrb[0].mxu0
    %v571 = vpop.f32.mrb[0].mxu0
    %v572 = vpop.f32.mrb[0].mxu0
    %573 = vdwg.mxu0
    %v574 = vmax.f32 %v569, 0.0
    %v575 = vld [vmem:[%s3] sm:$0xff]
    %v576 = vld [vmem:[%s3 + $0x8] sm:$0xff]
    %v577 = vld [vmem:[%s3 + $0x10] sm:$0xff]
    %v578 = vld [vmem:[%s3 + $0x18] sm:$0xff]
    %v579 = vld [vmem:[%s4] sm:$0x1]
    %v581 = vlaneseq
    %v582 = vshrl.u32 %v581, 7
    %v583 = vsub.s32 0, %v582
    %v584 = vrot.slane %v579, %v583
    %vm586 = vcmask 261120
    %v588 = vsel %vm586, %v574, 0
    %590 = vmatprep.subr.mxu0 0.0
    %591 = vmatpush1.msra.mxu0 %v575
    %592 = vmatprep.subr.mxu0 0.0
    %593 = vmatpush1.msra.mxu0 %v576
    %594 = vmatprep.subr.mxu0 0.0
    %595 = vmatpush1.msra.mxu0 %v577
    %596 = vmatprep.subr.mxu0 0.0
    %597 = vmatpush1.msra.mxu0 %v578
    %598 = vmatprep.subr.mxu0 0.0
    %599 = vmatpush1.msra.mxu0 0.0
    %600 = vmatprep.subr.mxu0 0.0
    %601 = vmatpush1.msra.mxu0 0.0
    %602 = vmatprep.subr.mxu0 0.0
    %603 = vmatpush1.msra.mxu0 0.0
    %604 = vmatprep.subr.mxu0 0.0
    %605 = vmatpush1.msra.mxu0 0.0
    %606 = vmatprep.subr.mxu0 0.0
    %607 = vmatpush1.msra.mxu0 0.0
    %608 = vmatprep.subr.mxu0 0.0
    %609 = vmatpush1.msra.mxu0 0.0
    %610 = vmatprep.subr.mxu0 0.0
    %611 = vmatpush1.msra.mxu0 0.0
    %612 = vmatprep.subr.mxu0 0.0
    %613 = vmatpush1.msra.mxu0 0.0
    %614 = vmatprep.subr.mxu0 0.0
    %615 = vmatpush1.msra.mxu0 0.0
    %616 = vmatprep.subr.mxu0 0.0
    %617 = vmatpush1.msra.mxu0 0.0
    %618 = vmatprep.subr.mxu0 0.0
    %619 = vmatpush1.msra.mxu0 0.0
    %620 = vmatprep.subr.mxu0 0.0
    %621 = vmatpush1.msra.mxu0 0.0
    %622 = vmatprep.subr.mxu0 0.0
    %623 = vmatpush1.msra.mxu0 0.0
    %624 = vmatprep.subr.mxu0 0.0
    %625 = vmatpush1.msra.mxu0 0.0
    %626 = vmatprep.subr.mxu0 0.0
    %627 = vmatpush1.msra.mxu0 0.0
    %628 = vmatprep.subr.mxu0 0.0
    %629 = vmatpush1.msra.mxu0 0.0
    %630 = vmatprep.subr.mxu0 0.0
    %631 = vmatpush1.msra.mxu0 0.0
    %632 = vmatprep.subr.mxu0 0.0
    %633 = vmatpush1.msra.mxu0 0.0
    %634 = vmatprep.subr.mxu0 0.0
    %635 = vmatpush1.msra.mxu0 0.0
    %636 = vmatprep.subr.mxu0 0.0
    %637 = vmatpush1.msra.mxu0 0.0
    %638 = vmatprep.subr.mxu0 0.0
    %639 = vmatpush1.msra.mxu0 0.0
    %640 = vmatprep.subr.mxu0 0.0
    %641 = vmatpush1.msra.mxu0 0.0
    %642 = vmatprep.subr.mxu0 0.0
    %643 = vmatpush1.msra.mxu0 0.0
    %644 = vmatprep.subr.mxu0 0.0
    %645 = vmatpush1.msra.mxu0 0.0
    %646 = vmatprep.subr.mxu0 0.0
    %647 = vmatpush1.msra.mxu0 0.0
    %648 = vmatprep.subr.mxu0 0.0
    %649 = vmatpush1.msra.mxu0 0.0
    %650 = vmatprep.subr.mxu0 0.0
    %651 = vmatpush1.msra.mxu0 0.0
    %652 = vmatprep.subr.mxu0 0.0
    %653 = vmatpush1.msra.mxu0 0.0
    %654 = vmatprep.mubr.f32.mxu0 0.0
    %655 = vmatmul.mubr.f32.gmra.mrb[0].mxu0 %v588
    %v656 = vpop.f32.mrb[0].mxu0
    %v657 = vadd.f32 %v584, %v656
    %v658 = vpop.f32.mrb[0].mxu0
    %659 = vdwg.mxu0
    %660 = vst [vmem:[#allocation2] sm:$0x3] %v657
    // Predicated region
    $region22: #{tpu_custom_call.1} parent=1 // pred_check
      _
    $region23: #{tpu_custom_call.1} parent=1 // pred_check_branch
      %662 = sbr.rel (0) target = $region25
    $region24: #{tpu_custom_call.1} parent=1 // pred_region
      %s664 = ssub.s32 32, 32
      %665 = vsyncadd [#allocation3], %s664
      %s667 = sshll.u32 [#allocation2], 4
      %s668 = int_to_ptr.vmem [resolvable:$true] %s667
      %670 = dma.vmem_to_hbm [thread:$0]  %s668, 32, %s5, [#allocation3]
    $region25: #{tpu_custom_call.1} parent=1 // pred_fallthru
      _
    // Predicated region
    $region26: #{tpu_custom_call.1} parent=1 // pred_check
      _
    $region27: #{tpu_custom_call.1} parent=1 // pred_check_branch
      %672 = sbr.rel (0) target = $region29
    $region28: #{tpu_custom_call.1} parent=1 // pred_region
      %673 = dma.done [#allocation3], 32
    $region29: #{tpu_custom_call.1} parent=1 // pred_fallthru
      _
    %674 = vsyncpa [#allocation3], 1

</llo_original>
